<compile_context>
chip_gen: v5e
topology: v5e:2x2
jax: 0.10.0
libtpu: 0.0.40
codegen_flags: <defaults>
</compile_context>

<pallas_src>
import jax
import jax.numpy as jnp
from jax import lax
from jax.experimental import pallas as pl
from jax.experimental.pallas import tpu as pltpu

# --- small, forward-consistent config -------------------------------------
INPUT_DIM = 16
HIDDEN_DIM = 32
LAYER_DIM = 2
OUTPUT_DIM = 4
SEQ_LEN = 8
DROPOUT_PROB = 0.1  # TODO(synk): nn.LSTM inter-layer dropout is train-only; inference forward is dropout-free, so it is intentionally omitted.


# --- Pallas kernel ----------------------------------------------------------
def _make_lstm_fc_kernel(S, H, L):
    G = 4 * H
    n_waves = S + L - 1

    def sigmoid(v):
        # 1 EUP tanh push instead of (potentially) exp + reciprocal.
        return 0.5 * jnp.tanh(0.5 * v) + 0.5

    def kernel(x_ref, wih0_ref, wbig_ref, bias_ref, wfc_ref, bfc_ref, out_ref):
        # x_ref    : (S, D)        input sequence (layer-0 input)
        # wih0_ref : (D, 4H)       layer-0 input->gates weights (pre-transposed)
        # wbig_ref : (L*H, L*4H)   fused block-bidiagonal recurrent/inter-layer weights
        # bias_ref : (1, L*4H)     combined biases [b0, b1, ...], b_l = b_ih_l + b_hh_l
        # wfc_ref  : (H, OUT)      final linear weight (pre-transposed)
        # bfc_ref  : (1, OUT)      final linear bias
        # out_ref  : (1, OUT)
        f32 = jnp.float32

        # Hoisted layer-0 input->gates matmul for the whole sequence (one MXU call,
        # off the serial chain). Kept as an SSA value -- no VMEM scratch round-trip.
        gx0 = jnp.dot(x_ref[...], wih0_ref[...], preferred_element_type=f32)  # (S, 4H)

        # Per-wave additive term: row w = [gx0[w] (zeros past the end), 0, ...] + biases.
        if L > 1:
            gx0_rows = jnp.concatenate(
                [gx0, jnp.zeros((L - 1, G), f32)], axis=0)                   # (n_waves, 4H)
            gx0_full = jnp.concatenate(
                [gx0_rows, jnp.zeros((n_waves, (L - 1) * G), f32)], axis=1)  # (n_waves, L*4H)
        else:
            gx0_full = gx0
        addend = gx0_full + bias_ref[...]                                    # (n_waves, L*4H)

        wbig = wbig_ref[...]                                                 # (L*H, L*4H)

        h = [jnp.zeros((1, H), f32) for _ in range(L)]
        c = [jnp.zeros((1, H), f32) for _ in range(L)]

        # Wavefront: at wave w, layer l (if active) processes time step t = w - l.
        # Fully unrolled static Python loop -> static slices, LLO can interleave waves.
        for w in range(n_waves):
            if w == 0:
                # All hidden states are zero: skip the matmul entirely.
                gates = addend[0:1, :]
            else:
                lhs = h[0] if L == 1 else jnp.concatenate(h, axis=1)         # (1, L*H)
                fused = jnp.dot(lhs, wbig, preferred_element_type=f32)       # (1, L*4H)
                gates = fused + addend[w:w + 1, :]

            sg = sigmoid(gates)   # one full-width EUP push per wave
            tg = jnp.tanh(gates)  # one full-width EUP push per wave

            for l in range(L):
                t = w - l
                if 0 <= t < S:
                    base = l * G
                    i_g = sg[:, base:base + H]
                    f_g = sg[:, base + H:base + 2 * H]
                    g_g = tg[:, base + 2 * H:base + 3 * H]
                    o_g = sg[:, base + 3 * H:base + 4 * H]
                    c[l] = f_g * c[l] + i_g * g_g
                    h[l] = o_g * jnp.tanh(c[l])

        # Final hidden state of the last layer -> fc.
        out = jnp.dot(h[L - 1], wfc_ref[...], preferred_element_type=f32) + bfc_ref[...]
        out_ref[...] = out.astype(out_ref.dtype)

    return kernel


# --- wrapper (glue: parameter packing + pallas_call) ------------------------
def lstm_forward_pallas(x, layers, w_fc, b_fc):
    S, D = x.shape
    H = HIDDEN_DIM
    L = len(layers)
    G = 4 * H

    # Layer-0 input->gates weights: (D, 4H)
    wih0 = jnp.asarray(layers[0][0].T, jnp.float32)

    # Fused block-bidiagonal weight matrix (L*H, L*4H):
    #   block (row l, col-block l)   = W_hh_l^T       (recurrent)
    #   block (row l, col-block l+1) = W_ih_{l+1}^T   (layer l -> layer l+1 input)
    wbig = jnp.zeros((L * H, L * G), jnp.float32)
    bias = jnp.zeros((1, L * G), jnp.float32)
    for l, (w_ih, w_hh, b_ih, b_hh) in enumerate(layers):
        wbig = wbig.at[l * H:(l + 1) * H, l * G:(l + 1) * G].set(w_hh.T)
        if l + 1 < L:
            w_ih_next = layers[l + 1][0]  # (4H, H)
            wbig = wbig.at[l * H:(l + 1) * H, (l + 1) * G:(l + 2) * G].set(w_ih_next.T)
        bias = bias.at[0, l * G:(l + 1) * G].set(b_ih + b_hh)

    wfc_t = jnp.asarray(w_fc.T, jnp.float32)        # (H, OUT)
    bfc = jnp.asarray(b_fc, jnp.float32)[None, :]   # (1, OUT)

    vmem = pl.BlockSpec(memory_space=pltpu.MemorySpace.VMEM)
    out = pl.pallas_call(
        _make_lstm_fc_kernel(S, H, L),
        out_shape=jax.ShapeDtypeStruct((1, OUTPUT_DIM), jnp.float32),
        in_specs=[vmem] * 6,
        out_specs=vmem,
    )(x.astype(jnp.float32), wih0, wbig, bias, wfc_t, bfc)
    return out  # (1, OUTPUT_DIM) — matches PyTorch (batch=1, output_dim)


# --- pure-JAX reference (for correctness check only) ------------------------
def lstm_forward_ref(x, layers, w_fc, b_fc):
    H = HIDDEN_DIM
    seq = x
    for (w_ih, w_hh, b_ih, b_hh) in layers:
        def step(carry, xt):
            h, c = carry
            gates = w_ih @ xt + w_hh @ h + b_ih + b_hh
            i_g = jax.nn.sigmoid(gates[0:H])
            f_g = jax.nn.sigmoid(gates[H:2 * H])
            g_g = jnp.tanh(gates[2 * H:3 * H])
            o_g = jax.nn.sigmoid(gates[3 * H:4 * H])
            c = f_g * c + i_g * g_g
            h = o_g * jnp.tanh(c)
            return (h, c), h
        (h, c), hs = lax.scan(step, (jnp.zeros(H), jnp.zeros(H)), seq)
        seq = hs
    return (seq[-1] @ w_fc.T + b_fc)[None, :]


# --- deterministic parameter init (PyTorch-style uniform(-1/sqrt(H), 1/sqrt(H)))
def make_params(key):
    H = HIDDEN_DIM
    k = 1.0 / jnp.sqrt(jnp.float32(H))
    keys = jax.random.split(key, 4 * LAYER_DIM + 2)
    layers = []
    idx = 0
    for l in range(LAYER_DIM):
        in_dim = INPUT_DIM if l == 0 else H
        w_ih = jax.random.uniform(keys[idx], (4 * H, in_dim), jnp.float32, -k, k); idx += 1
        w_hh = jax.random.uniform(keys[idx], (4 * H, H), jnp.float32, -k, k); idx += 1
        b_ih = jax.random.uniform(keys[idx], (4 * H,), jnp.float32, -k, k); idx += 1
        b_hh = jax.random.uniform(keys[idx], (4 * H,), jnp.float32, -k, k); idx += 1
        layers.append((w_ih, w_hh, b_ih, b_hh))
    w_fc = jax.random.uniform(keys[idx], (OUTPUT_DIM, H), jnp.float32, -k, k); idx += 1
    b_fc = jax.random.uniform(keys[idx], (OUTPUT_DIM,), jnp.float32, -k, k)
    return layers, w_fc, b_fc


if __name__ == "__main__":
    root = jax.random.PRNGKey(0)
    k_params, k_x = jax.random.split(root)
    layers, w_fc, b_fc = make_params(k_params)
    x = jax.random.normal(k_x, (SEQ_LEN, INPUT_DIM), jnp.float32)

    out = lstm_forward_pallas(x, layers, w_fc, b_fc)
    out = jax.block_until_ready(out)

    ref = lstm_forward_ref(x, layers, w_fc, b_fc)
    assert out.shape == (1, OUTPUT_DIM)
    assert jnp.allclose(out, ref, atol=1e-3, rtol=1e-3), (out, ref)

    print("KERNEL_OK")
</pallas_src>

<mosaic_0001>
module attributes {stable_mosaic.version = 11 : i64} {
  func.func @kernel(%arg0: memref<8x16xf32, #tpu.memory_space<vmem>>, %arg1: memref<16x128xf32, #tpu.memory_space<vmem>>, %arg2: memref<64x256xf32, #tpu.memory_space<vmem>>, %arg3: memref<1x256xf32, #tpu.memory_space<vmem>>, %arg4: memref<32x4xf32, #tpu.memory_space<vmem>>, %arg5: memref<1x4xf32, #tpu.memory_space<vmem>>, %arg6: memref<1x4xf32, #tpu.memory_space<vmem>>) attributes {dimension_semantics = [], scalar_prefetch = 0 : i64, scratch_operands = 0 : i64, tpu.core_type = #tpu.core_type<tc>} {
    %c0 = arith.constant 0 : index
    %c0_0 = arith.constant 0 : index
    %0 = vector.load %arg0[%c0, %c0_0] : memref<8x16xf32, #tpu.memory_space<vmem>>, vector<8x16xf32>
    %c0_1 = arith.constant 0 : index
    %c0_2 = arith.constant 0 : index
    %1 = vector.load %arg1[%c0_1, %c0_2] : memref<16x128xf32, #tpu.memory_space<vmem>>, vector<16x128xf32>
    %cst = arith.constant dense<0.000000e+00> : vector<8x128xf32>
    %2 = tpu.matmul %0, %1, %cst {dimension_numbers = #tpu.dot_dimension_numbers<[1], [0], [0], [1], [0, 0, 1, 1], [], []>} : vector<8x16xf32>, vector<16x128xf32>, vector<8x128xf32> -> vector<8x128xf32>
    %cst_3 = arith.constant 0.000000e+00 : f32
    %3 = vector.broadcast %cst_3 : f32 to vector<1x128xf32>
    %4 = tpu.concatenate %2, %3 in 0 : vector<8x128xf32>, vector<1x128xf32> -> vector<9x128xf32>
    %cst_4 = arith.constant 0.000000e+00 : f32
    %5 = vector.broadcast %cst_4 : f32 to vector<9x128xf32>
    %6 = tpu.concatenate %4, %5 in 1 : vector<9x128xf32>, vector<9x128xf32> -> vector<9x256xf32>
    %c0_5 = arith.constant 0 : index
    %c0_6 = arith.constant 0 : index
    %7 = vector.load %arg3[%c0_5, %c0_6] : memref<1x256xf32, #tpu.memory_space<vmem>>, vector<1x256xf32>
    %8 = vector.broadcast %7 : vector<1x256xf32> to vector<9x256xf32>
    %9 = arith.addf %6, %8 : vector<9x256xf32>
    %c0_7 = arith.constant 0 : index
    %c0_8 = arith.constant 0 : index
    %10 = vector.load %arg2[%c0_7, %c0_8] : memref<64x256xf32, #tpu.memory_space<vmem>>, vector<64x256xf32>
    %cst_9 = arith.constant 0.000000e+00 : f32
    %11 = vector.broadcast %cst_9 : f32 to vector<1x32xf32>
    %cst_10 = arith.constant 0.000000e+00 : f32
    %12 = vector.broadcast %cst_10 : f32 to vector<1x32xf32>
    %cst_11 = arith.constant 0.000000e+00 : f32
    %13 = vector.broadcast %cst_11 : f32 to vector<1x32xf32>
    %14 = vector.extract_strided_slice %9 {offsets = [0, 0], sizes = [1, 256], strides = [1, 1]} : vector<9x256xf32> to vector<1x256xf32>
    %cst_12 = arith.constant 5.000000e-01 : f32
    %15 = vector.broadcast %cst_12 : f32 to vector<1x256xf32>
    %16 = arith.mulf %15, %14 : vector<1x256xf32>
    %17 = math.tanh %16 : vector<1x256xf32>
    %cst_13 = arith.constant 5.000000e-01 : f32
    %18 = vector.broadcast %cst_13 : f32 to vector<1x256xf32>
    %19 = arith.mulf %18, %17 : vector<1x256xf32>
    %cst_14 = arith.constant 5.000000e-01 : f32
    %20 = vector.broadcast %cst_14 : f32 to vector<1x256xf32>
    %21 = arith.addf %19, %20 : vector<1x256xf32>
    %22 = math.tanh %14 : vector<1x256xf32>
    %23 = vector.extract_strided_slice %21 {offsets = [0, 0], sizes = [1, 32], strides = [1, 1]} : vector<1x256xf32> to vector<1x32xf32>
    %24 = vector.extract_strided_slice %21 {offsets = [0, 32], sizes = [1, 32], strides = [1, 1]} : vector<1x256xf32> to vector<1x32xf32>
    %25 = vector.extract_strided_slice %22 {offsets = [0, 64], sizes = [1, 32], strides = [1, 1]} : vector<1x256xf32> to vector<1x32xf32>
    %26 = vector.extract_strided_slice %21 {offsets = [0, 96], sizes = [1, 32], strides = [1, 1]} : vector<1x256xf32> to vector<1x32xf32>
    %27 = arith.mulf %24, %12 : vector<1x32xf32>
    %28 = arith.mulf %23, %25 : vector<1x32xf32>
    %29 = arith.addf %27, %28 : vector<1x32xf32>
    %30 = math.tanh %29 : vector<1x32xf32>
    %31 = arith.mulf %26, %30 : vector<1x32xf32>
    %32 = tpu.concatenate %31, %11 in 1 : vector<1x32xf32>, vector<1x32xf32> -> vector<1x64xf32>
    %cst_15 = arith.constant dense<0.000000e+00> : vector<1x256xf32>
    %33 = tpu.matmul %32, %10, %cst_15 {dimension_numbers = #tpu.dot_dimension_numbers<[1], [0], [0], [1], [0, 0, 1, 1], [], []>} : vector<1x64xf32>, vector<64x256xf32>, vector<1x256xf32> -> vector<1x256xf32>
    %34 = vector.extract_strided_slice %9 {offsets = [1, 0], sizes = [1, 256], strides = [1, 1]} : vector<9x256xf32> to vector<1x256xf32>
    %35 = arith.addf %33, %34 : vector<1x256xf32>
    %cst_16 = arith.constant 5.000000e-01 : f32
    %36 = vector.broadcast %cst_16 : f32 to vector<1x256xf32>
    %37 = arith.mulf %36, %35 : vector<1x256xf32>
    %38 = math.tanh %37 : vector<1x256xf32>
    %cst_17 = arith.constant 5.000000e-01 : f32
    %39 = vector.broadcast %cst_17 : f32 to vector<1x256xf32>
    %40 = arith.mulf %39, %38 : vector<1x256xf32>
    %cst_18 = arith.constant 5.000000e-01 : f32
    %41 = vector.broadcast %cst_18 : f32 to vector<1x256xf32>
    %42 = arith.addf %40, %41 : vector<1x256xf32>
    %43 = math.tanh %35 : vector<1x256xf32>
    %44 = vector.extract_strided_slice %42 {offsets = [0, 0], sizes = [1, 32], strides = [1, 1]} : vector<1x256xf32> to vector<1x32xf32>
    %45 = vector.extract_strided_slice %42 {offsets = [0, 32], sizes = [1, 32], strides = [1, 1]} : vector<1x256xf32> to vector<1x32xf32>
    %46 = vector.extract_strided_slice %43 {offsets = [0, 64], sizes = [1, 32], strides = [1, 1]} : vector<1x256xf32> to vector<1x32xf32>
    %47 = vector.extract_strided_slice %42 {offsets = [0, 96], sizes = [1, 32], strides = [1, 1]} : vector<1x256xf32> to vector<1x32xf32>
    %48 = arith.mulf %45, %29 : vector<1x32xf32>
    %49 = arith.mulf %44, %46 : vector<1x32xf32>
    %50 = arith.addf %48, %49 : vector<1x32xf32>
    %51 = math.tanh %50 : vector<1x32xf32>
    %52 = arith.mulf %47, %51 : vector<1x32xf32>
    %53 = vector.extract_strided_slice %42 {offsets = [0, 128], sizes = [1, 32], strides = [1, 1]} : vector<1x256xf32> to vector<1x32xf32>
    %54 = vector.extract_strided_slice %42 {offsets = [0, 160], sizes = [1, 32], strides = [1, 1]} : vector<1x256xf32> to vector<1x32xf32>
    %55 = vector.extract_strided_slice %43 {offsets = [0, 192], sizes = [1, 32], strides = [1, 1]} : vector<1x256xf32> to vector<1x32xf32>
    %56 = vector.extract_strided_slice %42 {offsets = [0, 224], sizes = [1, 32], strides = [1, 1]} : vector<1x256xf32> to vector<1x32xf32>
    %57 = arith.mulf %54, %13 : vector<1x32xf32>
    %58 = arith.mulf %53, %55 : vector<1x32xf32>
    %59 = arith.addf %57, %58 : vector<1x32xf32>
    %60 = math.tanh %59 : vector<1x32xf32>
    %61 = arith.mulf %56, %60 : vector<1x32xf32>
    %62 = tpu.concatenate %52, %61 in 1 : vector<1x32xf32>, vector<1x32xf32> -> vector<1x64xf32>
    %cst_19 = arith.constant dense<0.000000e+00> : vector<1x256xf32>
    %63 = tpu.matmul %62, %10, %cst_19 {dimension_numbers = #tpu.dot_dimension_numbers<[1], [0], [0], [1], [0, 0, 1, 1], [], []>} : vector<1x64xf32>, vector<64x256xf32>, vector<1x256xf32> -> vector<1x256xf32>
    %64 = vector.extract_strided_slice %9 {offsets = [2, 0], sizes = [1, 256], strides = [1, 1]} : vector<9x256xf32> to vector<1x256xf32>
    %65 = arith.addf %63, %64 : vector<1x256xf32>
    %cst_20 = arith.constant 5.000000e-01 : f32
    %66 = vector.broadcast %cst_20 : f32 to vector<1x256xf32>
    %67 = arith.mulf %66, %65 : vector<1x256xf32>
    %68 = math.tanh %67 : vector<1x256xf32>
    %cst_21 = arith.constant 5.000000e-01 : f32
    %69 = vector.broadcast %cst_21 : f32 to vector<1x256xf32>
    %70 = arith.mulf %69, %68 : vector<1x256xf32>
    %cst_22 = arith.constant 5.000000e-01 : f32
    %71 = vector.broadcast %cst_22 : f32 to vector<1x256xf32>
    %72 = arith.addf %70, %71 : vector<1x256xf32>
    %73 = math.tanh %65 : vector<1x256xf32>
    %74 = vector.extract_strided_slice %72 {offsets = [0, 0], sizes = [1, 32], strides = [1, 1]} : vector<1x256xf32> to vector<1x32xf32>
    %75 = vector.extract_strided_slice %72 {offsets = [0, 32], sizes = [1, 32], strides = [1, 1]} : vector<1x256xf32> to vector<1x32xf32>
    %76 = vector.extract_strided_slice %73 {offsets = [0, 64], sizes = [1, 32], strides = [1, 1]} : vector<1x256xf32> to vector<1x32xf32>
    %77 = vector.extract_strided_slice %72 {offsets = [0, 96], sizes = [1, 32], strides = [1, 1]} : vector<1x256xf32> to vector<1x32xf32>
    %78 = arith.mulf %75, %50 : vector<1x32xf32>
    %79 = arith.mulf %74, %76 : vector<1x32xf32>
    %80 = arith.addf %78, %79 : vector<1x32xf32>
    %81 = math.tanh %80 : vector<1x32xf32>
    %82 = arith.mulf %77, %81 : vector<1x32xf32>
    %83 = vector.extract_strided_slice %72 {offsets = [0, 128], sizes = [1, 32], strides = [1, 1]} : vector<1x256xf32> to vector<1x32xf32>
    %84 = vector.extract_strided_slice %72 {offsets = [0, 160], sizes = [1, 32], strides = [1, 1]} : vector<1x256xf32> to vector<1x32xf32>
    %85 = vector.extract_strided_slice %73 {offsets = [0, 192], sizes = [1, 32], strides = [1, 1]} : vector<1x256xf32> to vector<1x32xf32>
    %86 = vector.extract_strided_slice %72 {offsets = [0, 224], sizes = [1, 32], strides = [1, 1]} : vector<1x256xf32> to vector<1x32xf32>
    %87 = arith.mulf %84, %59 : vector<1x32xf32>
    %88 = arith.mulf %83, %85 : vector<1x32xf32>
    %89 = arith.addf %87, %88 : vector<1x32xf32>
    %90 = math.tanh %89 : vector<1x32xf32>
    %91 = arith.mulf %86, %90 : vector<1x32xf32>
    %92 = tpu.concatenate %82, %91 in 1 : vector<1x32xf32>, vector<1x32xf32> -> vector<1x64xf32>
    %cst_23 = arith.constant dense<0.000000e+00> : vector<1x256xf32>
    %93 = tpu.matmul %92, %10, %cst_23 {dimension_numbers = #tpu.dot_dimension_numbers<[1], [0], [0], [1], [0, 0, 1, 1], [], []>} : vector<1x64xf32>, vector<64x256xf32>, vector<1x256xf32> -> vector<1x256xf32>
    %94 = vector.extract_strided_slice %9 {offsets = [3, 0], sizes = [1, 256], strides = [1, 1]} : vector<9x256xf32> to vector<1x256xf32>
    %95 = arith.addf %93, %94 : vector<1x256xf32>
    %cst_24 = arith.constant 5.000000e-01 : f32
    %96 = vector.broadcast %cst_24 : f32 to vector<1x256xf32>
    %97 = arith.mulf %96, %95 : vector<1x256xf32>
    %98 = math.tanh %97 : vector<1x256xf32>
    %cst_25 = arith.constant 5.000000e-01 : f32
    %99 = vector.broadcast %cst_25 : f32 to vector<1x256xf32>
    %100 = arith.mulf %99, %98 : vector<1x256xf32>
    %cst_26 = arith.constant 5.000000e-01 : f32
    %101 = vector.broadcast %cst_26 : f32 to vector<1x256xf32>
    %102 = arith.addf %100, %101 : vector<1x256xf32>
    %103 = math.tanh %95 : vector<1x256xf32>
    %104 = vector.extract_strided_slice %102 {offsets = [0, 0], sizes = [1, 32], strides = [1, 1]} : vector<1x256xf32> to vector<1x32xf32>
    %105 = vector.extract_strided_slice %102 {offsets = [0, 32], sizes = [1, 32], strides = [1, 1]} : vector<1x256xf32> to vector<1x32xf32>
    %106 = vector.extract_strided_slice %103 {offsets = [0, 64], sizes = [1, 32], strides = [1, 1]} : vector<1x256xf32> to vector<1x32xf32>
    %107 = vector.extract_strided_slice %102 {offsets = [0, 96], sizes = [1, 32], strides = [1, 1]} : vector<1x256xf32> to vector<1x32xf32>
    %108 = arith.mulf %105, %80 : vector<1x32xf32>
    %109 = arith.mulf %104, %106 : vector<1x32xf32>
    %110 = arith.addf %108, %109 : vector<1x32xf32>
    %111 = math.tanh %110 : vector<1x32xf32>
    %112 = arith.mulf %107, %111 : vector<1x32xf32>
    %113 = vector.extract_strided_slice %102 {offsets = [0, 128], sizes = [1, 32], strides = [1, 1]} : vector<1x256xf32> to vector<1x32xf32>
    %114 = vector.extract_strided_slice %102 {offsets = [0, 160], sizes = [1, 32], strides = [1, 1]} : vector<1x256xf32> to vector<1x32xf32>
    %115 = vector.extract_strided_slice %103 {offsets = [0, 192], sizes = [1, 32], strides = [1, 1]} : vector<1x256xf32> to vector<1x32xf32>
    %116 = vector.extract_strided_slice %102 {offsets = [0, 224], sizes = [1, 32], strides = [1, 1]} : vector<1x256xf32> to vector<1x32xf32>
    %117 = arith.mulf %114, %89 : vector<1x32xf32>
    %118 = arith.mulf %113, %115 : vector<1x32xf32>
    %119 = arith.addf %117, %118 : vector<1x32xf32>
    %120 = math.tanh %119 : vector<1x32xf32>
    %121 = arith.mulf %116, %120 : vector<1x32xf32>
    %122 = tpu.concatenate %112, %121 in 1 : vector<1x32xf32>, vector<1x32xf32> -> vector<1x64xf32>
    %cst_27 = arith.constant dense<0.000000e+00> : vector<1x256xf32>
    %123 = tpu.matmul %122, %10, %cst_27 {dimension_numbers = #tpu.dot_dimension_numbers<[1], [0], [0], [1], [0, 0, 1, 1], [], []>} : vector<1x64xf32>, vector<64x256xf32>, vector<1x256xf32> -> vector<1x256xf32>
    %124 = vector.extract_strided_slice %9 {offsets = [4, 0], sizes = [1, 256], strides = [1, 1]} : vector<9x256xf32> to vector<1x256xf32>
    %125 = arith.addf %123, %124 : vector<1x256xf32>
    %cst_28 = arith.constant 5.000000e-01 : f32
    %126 = vector.broadcast %cst_28 : f32 to vector<1x256xf32>
    %127 = arith.mulf %126, %125 : vector<1x256xf32>
    %128 = math.tanh %127 : vector<1x256xf32>
    %cst_29 = arith.constant 5.000000e-01 : f32
    %129 = vector.broadcast %cst_29 : f32 to vector<1x256xf32>
    %130 = arith.mulf %129, %128 : vector<1x256xf32>
    %cst_30 = arith.constant 5.000000e-01 : f32
    %131 = vector.broadcast %cst_30 : f32 to vector<1x256xf32>
    %132 = arith.addf %130, %131 : vector<1x256xf32>
    %133 = math.tanh %125 : vector<1x256xf32>
    %134 = vector.extract_strided_slice %132 {offsets = [0, 0], sizes = [1, 32], strides = [1, 1]} : vector<1x256xf32> to vector<1x32xf32>
    %135 = vector.extract_strided_slice %132 {offsets = [0, 32], sizes = [1, 32], strides = [1, 1]} : vector<1x256xf32> to vector<1x32xf32>
    %136 = vector.extract_strided_slice %133 {offsets = [0, 64], sizes = [1, 32], strides = [1, 1]} : vector<1x256xf32> to vector<1x32xf32>
    %137 = vector.extract_strided_slice %132 {offsets = [0, 96], sizes = [1, 32], strides = [1, 1]} : vector<1x256xf32> to vector<1x32xf32>
    %138 = arith.mulf %135, %110 : vector<1x32xf32>
    %139 = arith.mulf %134, %136 : vector<1x32xf32>
    %140 = arith.addf %138, %139 : vector<1x32xf32>
    %141 = math.tanh %140 : vector<1x32xf32>
    %142 = arith.mulf %137, %141 : vector<1x32xf32>
    %143 = vector.extract_strided_slice %132 {offsets = [0, 128], sizes = [1, 32], strides = [1, 1]} : vector<1x256xf32> to vector<1x32xf32>
    %144 = vector.extract_strided_slice %132 {offsets = [0, 160], sizes = [1, 32], strides = [1, 1]} : vector<1x256xf32> to vector<1x32xf32>
    %145 = vector.extract_strided_slice %133 {offsets = [0, 192], sizes = [1, 32], strides = [1, 1]} : vector<1x256xf32> to vector<1x32xf32>
    %146 = vector.extract_strided_slice %132 {offsets = [0, 224], sizes = [1, 32], strides = [1, 1]} : vector<1x256xf32> to vector<1x32xf32>
    %147 = arith.mulf %144, %119 : vector<1x32xf32>
    %148 = arith.mulf %143, %145 : vector<1x32xf32>
    %149 = arith.addf %147, %148 : vector<1x32xf32>
    %150 = math.tanh %149 : vector<1x32xf32>
    %151 = arith.mulf %146, %150 : vector<1x32xf32>
    %152 = tpu.concatenate %142, %151 in 1 : vector<1x32xf32>, vector<1x32xf32> -> vector<1x64xf32>
    %cst_31 = arith.constant dense<0.000000e+00> : vector<1x256xf32>
    %153 = tpu.matmul %152, %10, %cst_31 {dimension_numbers = #tpu.dot_dimension_numbers<[1], [0], [0], [1], [0, 0, 1, 1], [], []>} : vector<1x64xf32>, vector<64x256xf32>, vector<1x256xf32> -> vector<1x256xf32>
    %154 = vector.extract_strided_slice %9 {offsets = [5, 0], sizes = [1, 256], strides = [1, 1]} : vector<9x256xf32> to vector<1x256xf32>
    %155 = arith.addf %153, %154 : vector<1x256xf32>
    %cst_32 = arith.constant 5.000000e-01 : f32
    %156 = vector.broadcast %cst_32 : f32 to vector<1x256xf32>
    %157 = arith.mulf %156, %155 : vector<1x256xf32>
    %158 = math.tanh %157 : vector<1x256xf32>
    %cst_33 = arith.constant 5.000000e-01 : f32
    %159 = vector.broadcast %cst_33 : f32 to vector<1x256xf32>
    %160 = arith.mulf %159, %158 : vector<1x256xf32>
    %cst_34 = arith.constant 5.000000e-01 : f32
    %161 = vector.broadcast %cst_34 : f32 to vector<1x256xf32>
    %162 = arith.addf %160, %161 : vector<1x256xf32>
    %163 = math.tanh %155 : vector<1x256xf32>
    %164 = vector.extract_strided_slice %162 {offsets = [0, 0], sizes = [1, 32], strides = [1, 1]} : vector<1x256xf32> to vector<1x32xf32>
    %165 = vector.extract_strided_slice %162 {offsets = [0, 32], sizes = [1, 32], strides = [1, 1]} : vector<1x256xf32> to vector<1x32xf32>
    %166 = vector.extract_strided_slice %163 {offsets = [0, 64], sizes = [1, 32], strides = [1, 1]} : vector<1x256xf32> to vector<1x32xf32>
    %167 = vector.extract_strided_slice %162 {offsets = [0, 96], sizes = [1, 32], strides = [1, 1]} : vector<1x256xf32> to vector<1x32xf32>
    %168 = arith.mulf %165, %140 : vector<1x32xf32>
    %169 = arith.mulf %164, %166 : vector<1x32xf32>
    %170 = arith.addf %168, %169 : vector<1x32xf32>
    %171 = math.tanh %170 : vector<1x32xf32>
    %172 = arith.mulf %167, %171 : vector<1x32xf32>
    %173 = vector.extract_strided_slice %162 {offsets = [0, 128], sizes = [1, 32], strides = [1, 1]} : vector<1x256xf32> to vector<1x32xf32>
    %174 = vector.extract_strided_slice %162 {offsets = [0, 160], sizes = [1, 32], strides = [1, 1]} : vector<1x256xf32> to vector<1x32xf32>
    %175 = vector.extract_strided_slice %163 {offsets = [0, 192], sizes = [1, 32], strides = [1, 1]} : vector<1x256xf32> to vector<1x32xf32>
    %176 = vector.extract_strided_slice %162 {offsets = [0, 224], sizes = [1, 32], strides = [1, 1]} : vector<1x256xf32> to vector<1x32xf32>
    %177 = arith.mulf %174, %149 : vector<1x32xf32>
    %178 = arith.mulf %173, %175 : vector<1x32xf32>
    %179 = arith.addf %177, %178 : vector<1x32xf32>
    %180 = math.tanh %179 : vector<1x32xf32>
    %181 = arith.mulf %176, %180 : vector<1x32xf32>
    %182 = tpu.concatenate %172, %181 in 1 : vector<1x32xf32>, vector<1x32xf32> -> vector<1x64xf32>
    %cst_35 = arith.constant dense<0.000000e+00> : vector<1x256xf32>
    %183 = tpu.matmul %182, %10, %cst_35 {dimension_numbers = #tpu.dot_dimension_numbers<[1], [0], [0], [1], [0, 0, 1, 1], [], []>} : vector<1x64xf32>, vector<64x256xf32>, vector<1x256xf32> -> vector<1x256xf32>
    %184 = vector.extract_strided_slice %9 {offsets = [6, 0], sizes = [1, 256], strides = [1, 1]} : vector<9x256xf32> to vector<1x256xf32>
    %185 = arith.addf %183, %184 : vector<1x256xf32>
    %cst_36 = arith.constant 5.000000e-01 : f32
    %186 = vector.broadcast %cst_36 : f32 to vector<1x256xf32>
    %187 = arith.mulf %186, %185 : vector<1x256xf32>
    %188 = math.tanh %187 : vector<1x256xf32>
    %cst_37 = arith.constant 5.000000e-01 : f32
    %189 = vector.broadcast %cst_37 : f32 to vector<1x256xf32>
    %190 = arith.mulf %189, %188 : vector<1x256xf32>
    %cst_38 = arith.constant 5.000000e-01 : f32
    %191 = vector.broadcast %cst_38 : f32 to vector<1x256xf32>
    %192 = arith.addf %190, %191 : vector<1x256xf32>
    %193 = math.tanh %185 : vector<1x256xf32>
    %194 = vector.extract_strided_slice %192 {offsets = [0, 0], sizes = [1, 32], strides = [1, 1]} : vector<1x256xf32> to vector<1x32xf32>
    %195 = vector.extract_strided_slice %192 {offsets = [0, 32], sizes = [1, 32], strides = [1, 1]} : vector<1x256xf32> to vector<1x32xf32>
    %196 = vector.extract_strided_slice %193 {offsets = [0, 64], sizes = [1, 32], strides = [1, 1]} : vector<1x256xf32> to vector<1x32xf32>
    %197 = vector.extract_strided_slice %192 {offsets = [0, 96], sizes = [1, 32], strides = [1, 1]} : vector<1x256xf32> to vector<1x32xf32>
    %198 = arith.mulf %195, %170 : vector<1x32xf32>
    %199 = arith.mulf %194, %196 : vector<1x32xf32>
    %200 = arith.addf %198, %199 : vector<1x32xf32>
    %201 = math.tanh %200 : vector<1x32xf32>
    %202 = arith.mulf %197, %201 : vector<1x32xf32>
    %203 = vector.extract_strided_slice %192 {offsets = [0, 128], sizes = [1, 32], strides = [1, 1]} : vector<1x256xf32> to vector<1x32xf32>
    %204 = vector.extract_strided_slice %192 {offsets = [0, 160], sizes = [1, 32], strides = [1, 1]} : vector<1x256xf32> to vector<1x32xf32>
    %205 = vector.extract_strided_slice %193 {offsets = [0, 192], sizes = [1, 32], strides = [1, 1]} : vector<1x256xf32> to vector<1x32xf32>
    %206 = vector.extract_strided_slice %192 {offsets = [0, 224], sizes = [1, 32], strides = [1, 1]} : vector<1x256xf32> to vector<1x32xf32>
    %207 = arith.mulf %204, %179 : vector<1x32xf32>
    %208 = arith.mulf %203, %205 : vector<1x32xf32>
    %209 = arith.addf %207, %208 : vector<1x32xf32>
    %210 = math.tanh %209 : vector<1x32xf32>
    %211 = arith.mulf %206, %210 : vector<1x32xf32>
    %212 = tpu.concatenate %202, %211 in 1 : vector<1x32xf32>, vector<1x32xf32> -> vector<1x64xf32>
    %cst_39 = arith.constant dense<0.000000e+00> : vector<1x256xf32>
    %213 = tpu.matmul %212, %10, %cst_39 {dimension_numbers = #tpu.dot_dimension_numbers<[1], [0], [0], [1], [0, 0, 1, 1], [], []>} : vector<1x64xf32>, vector<64x256xf32>, vector<1x256xf32> -> vector<1x256xf32>
    %214 = vector.extract_strided_slice %9 {offsets = [7, 0], sizes = [1, 256], strides = [1, 1]} : vector<9x256xf32> to vector<1x256xf32>
    %215 = arith.addf %213, %214 : vector<1x256xf32>
    %cst_40 = arith.constant 5.000000e-01 : f32
    %216 = vector.broadcast %cst_40 : f32 to vector<1x256xf32>
    %217 = arith.mulf %216, %215 : vector<1x256xf32>
    %218 = math.tanh %217 : vector<1x256xf32>
    %cst_41 = arith.constant 5.000000e-01 : f32
    %219 = vector.broadcast %cst_41 : f32 to vector<1x256xf32>
    %220 = arith.mulf %219, %218 : vector<1x256xf32>
    %cst_42 = arith.constant 5.000000e-01 : f32
    %221 = vector.broadcast %cst_42 : f32 to vector<1x256xf32>
    %222 = arith.addf %220, %221 : vector<1x256xf32>
    %223 = math.tanh %215 : vector<1x256xf32>
    %224 = vector.extract_strided_slice %222 {offsets = [0, 0], sizes = [1, 32], strides = [1, 1]} : vector<1x256xf32> to vector<1x32xf32>
    %225 = vector.extract_strided_slice %222 {offsets = [0, 32], sizes = [1, 32], strides = [1, 1]} : vector<1x256xf32> to vector<1x32xf32>
    %226 = vector.extract_strided_slice %223 {offsets = [0, 64], sizes = [1, 32], strides = [1, 1]} : vector<1x256xf32> to vector<1x32xf32>
    %227 = vector.extract_strided_slice %222 {offsets = [0, 96], sizes = [1, 32], strides = [1, 1]} : vector<1x256xf32> to vector<1x32xf32>
    %228 = arith.mulf %225, %200 : vector<1x32xf32>
    %229 = arith.mulf %224, %226 : vector<1x32xf32>
    %230 = arith.addf %228, %229 : vector<1x32xf32>
    %231 = math.tanh %230 : vector<1x32xf32>
    %232 = arith.mulf %227, %231 : vector<1x32xf32>
    %233 = vector.extract_strided_slice %222 {offsets = [0, 128], sizes = [1, 32], strides = [1, 1]} : vector<1x256xf32> to vector<1x32xf32>
    %234 = vector.extract_strided_slice %222 {offsets = [0, 160], sizes = [1, 32], strides = [1, 1]} : vector<1x256xf32> to vector<1x32xf32>
    %235 = vector.extract_strided_slice %223 {offsets = [0, 192], sizes = [1, 32], strides = [1, 1]} : vector<1x256xf32> to vector<1x32xf32>
    %236 = vector.extract_strided_slice %222 {offsets = [0, 224], sizes = [1, 32], strides = [1, 1]} : vector<1x256xf32> to vector<1x32xf32>
    %237 = arith.mulf %234, %209 : vector<1x32xf32>
    %238 = arith.mulf %233, %235 : vector<1x32xf32>
    %239 = arith.addf %237, %238 : vector<1x32xf32>
    %240 = math.tanh %239 : vector<1x32xf32>
    %241 = arith.mulf %236, %240 : vector<1x32xf32>
    %242 = tpu.concatenate %232, %241 in 1 : vector<1x32xf32>, vector<1x32xf32> -> vector<1x64xf32>
    %cst_43 = arith.constant dense<0.000000e+00> : vector<1x256xf32>
    %243 = tpu.matmul %242, %10, %cst_43 {dimension_numbers = #tpu.dot_dimension_numbers<[1], [0], [0], [1], [0, 0, 1, 1], [], []>} : vector<1x64xf32>, vector<64x256xf32>, vector<1x256xf32> -> vector<1x256xf32>
    %244 = vector.extract_strided_slice %9 {offsets = [8, 0], sizes = [1, 256], strides = [1, 1]} : vector<9x256xf32> to vector<1x256xf32>
    %245 = arith.addf %243, %244 : vector<1x256xf32>
    %cst_44 = arith.constant 5.000000e-01 : f32
    %246 = vector.broadcast %cst_44 : f32 to vector<1x256xf32>
    %247 = arith.mulf %246, %245 : vector<1x256xf32>
    %248 = math.tanh %247 : vector<1x256xf32>
    %cst_45 = arith.constant 5.000000e-01 : f32
    %249 = vector.broadcast %cst_45 : f32 to vector<1x256xf32>
    %250 = arith.mulf %249, %248 : vector<1x256xf32>
    %cst_46 = arith.constant 5.000000e-01 : f32
    %251 = vector.broadcast %cst_46 : f32 to vector<1x256xf32>
    %252 = arith.addf %250, %251 : vector<1x256xf32>
    %253 = math.tanh %245 : vector<1x256xf32>
    %254 = vector.extract_strided_slice %252 {offsets = [0, 128], sizes = [1, 32], strides = [1, 1]} : vector<1x256xf32> to vector<1x32xf32>
    %255 = vector.extract_strided_slice %252 {offsets = [0, 160], sizes = [1, 32], strides = [1, 1]} : vector<1x256xf32> to vector<1x32xf32>
    %256 = vector.extract_strided_slice %253 {offsets = [0, 192], sizes = [1, 32], strides = [1, 1]} : vector<1x256xf32> to vector<1x32xf32>
    %257 = vector.extract_strided_slice %252 {offsets = [0, 224], sizes = [1, 32], strides = [1, 1]} : vector<1x256xf32> to vector<1x32xf32>
    %258 = arith.mulf %255, %239 : vector<1x32xf32>
    %259 = arith.mulf %254, %256 : vector<1x32xf32>
    %260 = arith.addf %258, %259 : vector<1x32xf32>
    %261 = math.tanh %260 : vector<1x32xf32>
    %262 = arith.mulf %257, %261 : vector<1x32xf32>
    %c0_47 = arith.constant 0 : index
    %c0_48 = arith.constant 0 : index
    %263 = vector.load %arg4[%c0_47, %c0_48] : memref<32x4xf32, #tpu.memory_space<vmem>>, vector<32x4xf32>
    %cst_49 = arith.constant dense<0.000000e+00> : vector<1x4xf32>
    %264 = tpu.matmul %262, %263, %cst_49 {dimension_numbers = #tpu.dot_dimension_numbers<[1], [0], [0], [1], [0, 0, 1, 1], [], []>} : vector<1x32xf32>, vector<32x4xf32>, vector<1x4xf32> -> vector<1x4xf32>
    %c0_50 = arith.constant 0 : index
    %c0_51 = arith.constant 0 : index
    %265 = vector.load %arg5[%c0_50, %c0_51] : memref<1x4xf32, #tpu.memory_space<vmem>>, vector<1x4xf32>
    %266 = arith.addf %264, %265 : vector<1x4xf32>
    %c0_52 = arith.constant 0 : index
    %c0_53 = arith.constant 0 : index
    %267 = vector.load %arg6[%c0_52, %c0_53] : memref<1x4xf32, #tpu.memory_space<vmem>>, vector<1x4xf32>
    tpu.vector_store %arg6[%c0_52, %c0_53], %266 {strides = array<i32>} : memref<1x4xf32, #tpu.memory_space<vmem>>, vector<1x4xf32>,
    return
  }
}

</mosaic_0001>

<llo_original>
// kernel: tpu_custom_call.1
$region0: #{tpu_custom_call.1}
  #allocation0 [shape = 'u32[]', space=smem, size = 0x4, offset = 0x4, fixed_abs, tag = 'smem constant byte address 0x4 - core index']
  #allocation1 [shape = 'u32[72,128]{1,0:T(1,128)}', space=vmem, size = 0x9000, scoped, tag = 'internal scratch']
  %s0 = inlined_call_operand.vmem [shape: f32[8,16], index: 0, kind: input, shape index: {}]
  %s1 = inlined_call_operand.vmem [shape: f32[16,128], index: 1, kind: input, shape index: {}]
  %s2 = inlined_call_operand.hbm [shape: f32[64,256], index: 2, kind: input, shape index: {}]
  %s3 = inlined_call_operand.vmem [shape: f32[1,256], index: 3, kind: input, shape index: {}]
  %s4 = inlined_call_operand.vmem [shape: f32[32,4], index: 4, kind: input, shape index: {}]
  %s5 = inlined_call_operand.vmem [shape: f32[1,4], index: 5, kind: input, shape index: {}]
  %s6 = inlined_call_operand.hbm [shape: f32[1,4], index: 6, kind: output, shape index: {}]
  %s7 = sld [smem:[#allocation0]]
  $region38: #{tpu_custom_call.1} parent=0
    _
  %s9 = ssub.s32 1, %s7
  %s10 = scalar_select 0, %s9, %s7
  $region1: #{tpu_custom_call.1} parent=0
    #allocation2 [shape = 'u8[65536]{0}', space=vmem, size = 0x10000, scoped, tag = 'input window, operand 2, single buffered']
    #allocation3 [shape = 's32[1]{0}', space=sflag, size = 0x4, scoped, tag = 'scoped memory for tpu_custom_call.1']
    #allocation4 [shape = 's32[1]{0}', space=sflag, size = 0x4, scoped, tag = 'scoped memory for tpu_custom_call.1']
    #allocation5 [shape = 'u8[512]{0}', space=vmem, size = 0x400, scoped, tag = 'output window, operand 0, single buffered']
    %11 = vsyncpa [#allocation3], 0
    %12 = vsyncpa [#allocation4], 0
    // Predicated region
    $region2: #{tpu_custom_call.1} parent=1 // pred_check
      _
    $region3: #{tpu_custom_call.1} parent=1 // pred_check_branch
      %14 = sbr.rel (0) target = $region5
    $region4: #{tpu_custom_call.1} parent=1 // pred_region
      _
    $region5: #{tpu_custom_call.1} parent=1 // pred_fallthru
      _
    // Predicated region
    $region6: #{tpu_custom_call.1} parent=1 // pred_check
      _
    $region7: #{tpu_custom_call.1} parent=1 // pred_check_branch
      %16 = sbr.rel (0) target = $region9
    $region8: #{tpu_custom_call.1} parent=1 // pred_region
      _
    $region9: #{tpu_custom_call.1} parent=1 // pred_fallthru
      _
    // Predicated region
    $region10: #{tpu_custom_call.1} parent=1 // pred_check
      _
    $region11: #{tpu_custom_call.1} parent=1 // pred_check_branch
      %18 = sbr.rel (0) target = $region13
    $region12: #{tpu_custom_call.1} parent=1 // pred_region
      %20 = vsyncadd [#allocation3], 0
      %s21 = sshll.u32 %s2, 4
      %s22 = int_to_ptr.hbm [resolvable:$true] %s21
      %s23 = sshll.u32 [#allocation2], 4
      %s24 = int_to_ptr.vmem [resolvable:$true] %s23
      %29 = dma.hbm_to_vmem [thread:$0]  %s22, 2048, %s24, [#allocation3], 256, 256, 16
    $region13: #{tpu_custom_call.1} parent=1 // pred_fallthru
      _
    // Predicated region
    $region14: #{tpu_custom_call.1} parent=1 // pred_check
      _
    $region15: #{tpu_custom_call.1} parent=1 // pred_check_branch
      %31 = sbr.rel (0) target = $region17
    $region16: #{tpu_custom_call.1} parent=1 // pred_region
      _
    $region17: #{tpu_custom_call.1} parent=1 // pred_fallthru
      _
    // Predicated region
    $region18: #{tpu_custom_call.1} parent=1 // pred_check
      _
    $region19: #{tpu_custom_call.1} parent=1 // pred_check_branch
      %33 = sbr.rel (0) target = $region21
    $region20: #{tpu_custom_call.1} parent=1 // pred_region
      _
    $region21: #{tpu_custom_call.1} parent=1 // pred_fallthru
      _
    // Predicated region
    $region22: #{tpu_custom_call.1} parent=1 // pred_check
      _
    $region23: #{tpu_custom_call.1} parent=1 // pred_check_branch
      %35 = sbr.rel (0) target = $region25
    $region24: #{tpu_custom_call.1} parent=1 // pred_region
      _
    $region25: #{tpu_custom_call.1} parent=1 // pred_fallthru
      _
    // Predicated region
    $region26: #{tpu_custom_call.1} parent=1 // pred_check
      _
    $region27: #{tpu_custom_call.1} parent=1 // pred_check_branch
      %37 = sbr.rel (0) target = $region29
    $region28: #{tpu_custom_call.1} parent=1 // pred_region
      %39 = dma.done [#allocation3], 2048
    $region29: #{tpu_custom_call.1} parent=1 // pred_fallthru
      _
    %v40 = vld [vmem:[%s0] sm:$0xff]
    %v41 = vld [vmem:[%s1] sm:$0xff]
    %v42 = vld [vmem:[%s1 + $0x8] sm:$0xff]
    %vm43 = vcmask 130048
    %v45 = vsel %vm43, %v40, 0
    %47 = vmatpush.msra.mxu0 0.0
    %48 = vmatpush.msra.mxu0 0.0
    %49 = vmatpush.msra.mxu0 0.0
    %50 = vmatpush.msra.mxu0 0.0
    %51 = vmatpush.msra.mxu0 0.0
    %52 = vmatpush.msra.mxu0 0.0
    %53 = vmatpush.msra.mxu0 0.0
    %54 = vmatpush.msra.mxu0 0.0
    %55 = vmatpush.msra.mxu0 0.0
    %56 = vmatpush.msra.mxu0 0.0
    %57 = vmatpush.msra.mxu0 0.0
    %58 = vmatpush.msra.mxu0 0.0
    %59 = vmatpush.msra.mxu0 0.0
    %60 = vmatpush.msra.mxu0 0.0
    %61 = vmatpush.msra.mxu0 %v42
    %62 = vmatpush.msra.mxu0 %v41
    %63 = vmatmul.f32.gmra.mxu0 %v45
    %v64 = vpop.f32.mrf.mxu0
    %v65 = vadd.f32 0.0, %v64
    %66 = vdwg.mxu0
    %v67 = vld [vmem:[%s3] sm:$0x3]
    %v69 = vperm.slane %v67, 0
    %v70 = vperm.slane %v67, 1
    %v73 = vadd.f32 %v65, %v69
    %v74 = vadd.f32 %v70, 0.0
    %v75 = vld [vmem:[#allocation2] sm:$0xff]
    %v76 = vld [vmem:[#allocation2 + $0x8] sm:$0xff]
    %v77 = vld [vmem:[#allocation2 + $0x10] sm:$0xff]
    %v78 = vld [vmem:[#allocation2 + $0x18] sm:$0xff]
    %v79 = vld [vmem:[#allocation2 + $0x20] sm:$0xff]
    %v80 = vld [vmem:[#allocation2 + $0x28] sm:$0xff]
    %v81 = vld [vmem:[#allocation2 + $0x30] sm:$0xff]
    %v82 = vld [vmem:[#allocation2 + $0x38] sm:$0xff]
    %v83 = vld [vmem:[#allocation2 + $0x40] sm:$0xff]
    %v84 = vld [vmem:[#allocation2 + $0x48] sm:$0xff]
    %v85 = vld [vmem:[#allocation2 + $0x50] sm:$0xff]
    %v86 = vld [vmem:[#allocation2 + $0x58] sm:$0xff]
    %v87 = vld [vmem:[#allocation2 + $0x60] sm:$0xff]
    %v88 = vld [vmem:[#allocation2 + $0x68] sm:$0xff]
    %v89 = vld [vmem:[#allocation2 + $0x70] sm:$0xff]
    %v90 = vld [vmem:[#allocation2 + $0x78] sm:$0xff]
    %v91 = vmul.f32 %v73, 0.5
    %v92 = vtanh.pop %v91
    %v93 = vmul.f32 %v92, 0.5
    %v94 = vadd.f32 %v93, 0.5
    %v95 = vtanh.pop %v73
    %v96 = vmul.f32 %v94, 0.0
    %98 = vrot.lane.b32.xlu0 %v95, 64
    %v99 = vpop.permute.xlu0 %98
    %v101 = vmul.f32 %v94, %v99
    %103 = vrot.lane.b32.xlu0 %v101, 32
    %v104 = vpop.permute.xlu0 %103
    %v106 = vadd.f32 %v96, %v104
    %v107 = vtanh.pop %v106
    %109 = vrot.lane.b32.xlu0 %v107, 64
    %v110 = vpop.permute.xlu0 %109
    %v112 = vmul.f32 %v94, %v110
    %114 = vrot.lane.b32.xlu0 %v112, 32
    %v115 = vpop.permute.xlu0 %114
    %vm117 = vcmask 261120
    %v118 = vsel %vm117, %v115, 0.0
    %v121 = vrot.slane %v73, 1
    %v122 = vrot.slane %v74, 1
    %vm125 = vcmask 523264
    %v127 = vsel %vm125, %v118, 0
    %129 = vmatpush.msra.mxu0 0.0
    %130 = vmatpush.msra.mxu0 0.0
    %131 = vmatpush.msra.mxu0 0.0
    %132 = vmatpush.msra.mxu0 0.0
    %133 = vmatpush.msra.mxu0 0.0
    %134 = vmatpush.msra.mxu0 0.0
    %135 = vmatpush.msra.mxu0 0.0
    %136 = vmatpush.msra.mxu0 0.0
    %137 = vmatpush.msra.mxu0 %v89
    %138 = vmatpush.msra.mxu0 %v87
    %139 = vmatpush.msra.mxu0 %v85
    %140 = vmatpush.msra.mxu0 %v83
    %141 = vmatpush.msra.mxu0 %v81
    %142 = vmatpush.msra.mxu0 %v79
    %143 = vmatpush.msra.mxu0 %v77
    %144 = vmatpush.msra.mxu0 %v75
    %145 = vmatmul.f32.gmra.mxu0 %v127
    %v146 = vpop.f32.mrf.mxu0
    %v147 = vadd.f32 %v121, %v146
    %148 = vdwg.mxu0
    %149 = vmatpush.msra.mxu0 0.0
    %150 = vmatpush.msra.mxu0 0.0
    %151 = vmatpush.msra.mxu0 0.0
    %152 = vmatpush.msra.mxu0 0.0
    %153 = vmatpush.msra.mxu0 0.0
    %154 = vmatpush.msra.mxu0 0.0
    %155 = vmatpush.msra.mxu0 0.0
    %156 = vmatpush.msra.mxu0 0.0
    %157 = vmatpush.msra.mxu0 %v90
    %158 = vmatpush.msra.mxu0 %v88
    %159 = vmatpush.msra.mxu0 %v86
    %160 = vmatpush.msra.mxu0 %v84
    %161 = vmatpush.msra.mxu0 %v82
    %162 = vmatpush.msra.mxu0 %v80
    %163 = vmatpush.msra.mxu0 %v78
    %164 = vmatpush.msra.mxu0 %v76
    %165 = vmatmul.f32.gmra.mxu0 %v127
    %v166 = vpop.f32.mrf.mxu0
    %v167 = vadd.f32 %v122, %v166
    %168 = vdwg.mxu0
    %v169 = vmul.f32 %v147, 0.5
    %v170 = vmul.f32 %v167, 0.5
    %v171 = vtanh.pop %v169
    %v172 = vtanh.pop %v170
    %v173 = vmul.f32 %v171, 0.5
    %v174 = vmul.f32 %v172, 0.5
    %v175 = vadd.f32 %v173, 0.5
    %v176 = vadd.f32 %v174, 0.5
    %v177 = vtanh.pop %v147
    %v178 = vtanh.pop %v167
    %v179 = vmul.f32 %v175, %v106
    %181 = vrot.lane.b32.xlu0 %v177, 64
    %v182 = vpop.permute.xlu0 %181
    %v184 = vmul.f32 %v175, %v182
    %186 = vrot.lane.b32.xlu0 %v184, 32
    %v187 = vpop.permute.xlu0 %186
    %v189 = vadd.f32 %v179, %v187
    %v190 = vtanh.pop %v189
    %192 = vrot.lane.b32.xlu0 %v190, 64
    %v193 = vpop.permute.xlu0 %192
    %v195 = vmul.f32 %v175, %v193
    %v196 = vmul.f32 %v176, 0.0
    %198 = vrot.lane.b32.xlu0 %v178, 64
    %v199 = vpop.permute.xlu0 %198
    %v201 = vmul.f32 %v176, %v199
    %203 = vrot.lane.b32.xlu0 %v201, 32
    %v204 = vpop.permute.xlu0 %203
    %v206 = vadd.f32 %v196, %v204
    %v207 = vtanh.pop %v206
    %209 = vrot.lane.b32.xlu0 %v207, 64
    %v210 = vpop.permute.xlu0 %209
    %v212 = vmul.f32 %v176, %v210
    %214 = vrot.lane.b32.xlu0 %v195, 32
    %v215 = vpop.permute.xlu0 %214
    %218 = vrot.lane.b32.xlu0 %v212, 64
    %v219 = vpop.permute.xlu0 %218
    %v221 = vsel %vm117, %v215, %v219
    %v222 = vrot.slane %v73, 2
    %v223 = vrot.slane %v74, 2
    %v227 = vsel %vm125, %v221, 0
    %229 = vmatpush.msra.mxu0 0.0
    %230 = vmatpush.msra.mxu0 0.0
    %231 = vmatpush.msra.mxu0 0.0
    %232 = vmatpush.msra.mxu0 0.0
    %233 = vmatpush.msra.mxu0 0.0
    %234 = vmatpush.msra.mxu0 0.0
    %235 = vmatpush.msra.mxu0 0.0
    %236 = vmatpush.msra.mxu0 0.0
    %237 = vmatpush.msra.mxu0 %v89
    %238 = vmatpush.msra.mxu0 %v87
    %239 = vmatpush.msra.mxu0 %v85
    %240 = vmatpush.msra.mxu0 %v83
    %241 = vmatpush.msra.mxu0 %v81
    %242 = vmatpush.msra.mxu0 %v79
    %243 = vmatpush.msra.mxu0 %v77
    %244 = vmatpush.msra.mxu0 %v75
    %245 = vmatmul.f32.gmra.mxu0 %v227
    %v246 = vpop.f32.mrf.mxu0
    %v247 = vadd.f32 %v222, %v246
    %248 = vdwg.mxu0
    %249 = vmatpush.msra.mxu0 0.0
    %250 = vmatpush.msra.mxu0 0.0
    %251 = vmatpush.msra.mxu0 0.0
    %252 = vmatpush.msra.mxu0 0.0
    %253 = vmatpush.msra.mxu0 0.0
    %254 = vmatpush.msra.mxu0 0.0
    %255 = vmatpush.msra.mxu0 0.0
    %256 = vmatpush.msra.mxu0 0.0
    %257 = vmatpush.msra.mxu0 %v90
    %258 = vmatpush.msra.mxu0 %v88
    %259 = vmatpush.msra.mxu0 %v86
    %260 = vmatpush.msra.mxu0 %v84
    %261 = vmatpush.msra.mxu0 %v82
    %262 = vmatpush.msra.mxu0 %v80
    %263 = vmatpush.msra.mxu0 %v78
    %264 = vmatpush.msra.mxu0 %v76
    %265 = vmatmul.f32.gmra.mxu0 %v227
    %v266 = vpop.f32.mrf.mxu0
    %v267 = vadd.f32 %v223, %v266
    %268 = vdwg.mxu0
    %v269 = vmul.f32 %v247, 0.5
    %v270 = vmul.f32 %v267, 0.5
    %v271 = vtanh.pop %v269
    %v272 = vtanh.pop %v270
    %v273 = vmul.f32 %v271, 0.5
    %v274 = vmul.f32 %v272, 0.5
    %v275 = vadd.f32 %v273, 0.5
    %v276 = vadd.f32 %v274, 0.5
    %v277 = vtanh.pop %v247
    %v278 = vtanh.pop %v267
    %v279 = vmul.f32 %v275, %v189
    %281 = vrot.lane.b32.xlu0 %v277, 64
    %v282 = vpop.permute.xlu0 %281
    %v284 = vmul.f32 %v275, %v282
    %286 = vrot.lane.b32.xlu0 %v284, 32
    %v287 = vpop.permute.xlu0 %286
    %v289 = vadd.f32 %v279, %v287
    %v290 = vtanh.pop %v289
    %292 = vrot.lane.b32.xlu0 %v290, 64
    %v293 = vpop.permute.xlu0 %292
    %v295 = vmul.f32 %v275, %v293
    %v296 = vmul.f32 %v276, %v206
    %298 = vrot.lane.b32.xlu0 %v278, 64
    %v299 = vpop.permute.xlu0 %298
    %v301 = vmul.f32 %v276, %v299
    %303 = vrot.lane.b32.xlu0 %v301, 32
    %v304 = vpop.permute.xlu0 %303
    %v306 = vadd.f32 %v296, %v304
    %v307 = vtanh.pop %v306
    %309 = vrot.lane.b32.xlu0 %v307, 64
    %v310 = vpop.permute.xlu0 %309
    %v312 = vmul.f32 %v276, %v310
    %314 = vrot.lane.b32.xlu0 %v295, 32
    %v315 = vpop.permute.xlu0 %314
    %318 = vrot.lane.b32.xlu0 %v312, 64
    %v319 = vpop.permute.xlu0 %318
    %v321 = vsel %vm117, %v315, %v319
    %v322 = vrot.slane %v73, 3
    %v323 = vrot.slane %v74, 3
    %v327 = vsel %vm125, %v321, 0
    %329 = vmatpush.msra.mxu0 0.0
    %330 = vmatpush.msra.mxu0 0.0
    %331 = vmatpush.msra.mxu0 0.0
    %332 = vmatpush.msra.mxu0 0.0
    %333 = vmatpush.msra.mxu0 0.0
    %334 = vmatpush.msra.mxu0 0.0
    %335 = vmatpush.msra.mxu0 0.0
    %336 = vmatpush.msra.mxu0 0.0
    %337 = vmatpush.msra.mxu0 %v89
    %338 = vmatpush.msra.mxu0 %v87
    %339 = vmatpush.msra.mxu0 %v85
    %340 = vmatpush.msra.mxu0 %v83
    %341 = vmatpush.msra.mxu0 %v81
    %342 = vmatpush.msra.mxu0 %v79
    %343 = vmatpush.msra.mxu0 %v77
    %344 = vmatpush.msra.mxu0 %v75
    %345 = vmatmul.f32.gmra.mxu0 %v327
    %v346 = vpop.f32.mrf.mxu0
    %v347 = vadd.f32 %v322, %v346
    %348 = vdwg.mxu0
    %349 = vmatpush.msra.mxu0 0.0
    %350 = vmatpush.msra.mxu0 0.0
    %351 = vmatpush.msra.mxu0 0.0
    %352 = vmatpush.msra.mxu0 0.0
    %353 = vmatpush.msra.mxu0 0.0
    %354 = vmatpush.msra.mxu0 0.0
    %355 = vmatpush.msra.mxu0 0.0
    %356 = vmatpush.msra.mxu0 0.0
    %357 = vmatpush.msra.mxu0 %v90
    %358 = vmatpush.msra.mxu0 %v88
    %359 = vmatpush.msra.mxu0 %v86
    %360 = vmatpush.msra.mxu0 %v84
    %361 = vmatpush.msra.mxu0 %v82
    %362 = vmatpush.msra.mxu0 %v80
    %363 = vmatpush.msra.mxu0 %v78
    %364 = vmatpush.msra.mxu0 %v76
    %365 = vmatmul.f32.gmra.mxu0 %v327
    %v366 = vpop.f32.mrf.mxu0
    %v367 = vadd.f32 %v323, %v366
    %368 = vdwg.mxu0
    %v369 = vmul.f32 %v347, 0.5
    %v370 = vmul.f32 %v367, 0.5
    %v371 = vtanh.pop %v369
    %v372 = vtanh.pop %v370
    %v373 = vmul.f32 %v371, 0.5
    %v374 = vmul.f32 %v372, 0.5
    %v375 = vadd.f32 %v373, 0.5
    %v376 = vadd.f32 %v374, 0.5
    %v377 = vtanh.pop %v347
    %v378 = vtanh.pop %v367
    %v379 = vmul.f32 %v375, %v289
    %381 = vrot.lane.b32.xlu0 %v377, 64
    %v382 = vpop.permute.xlu0 %381
    %v384 = vmul.f32 %v375, %v382
    %386 = vrot.lane.b32.xlu0 %v384, 32
    %v387 = vpop.permute.xlu0 %386
    %v389 = vadd.f32 %v379, %v387
    %v390 = vtanh.pop %v389
    %392 = vrot.lane.b32.xlu0 %v390, 64
    %v393 = vpop.permute.xlu0 %392
    %v395 = vmul.f32 %v375, %v393
    %v396 = vmul.f32 %v376, %v306
    %398 = vrot.lane.b32.xlu0 %v378, 64
    %v399 = vpop.permute.xlu0 %398
    %v401 = vmul.f32 %v376, %v399
    %403 = vrot.lane.b32.xlu0 %v401, 32
    %v404 = vpop.permute.xlu0 %403
    %v406 = vadd.f32 %v396, %v404
    %v407 = vtanh.pop %v406
    %409 = vrot.lane.b32.xlu0 %v407, 64
    %v410 = vpop.permute.xlu0 %409
    %v412 = vmul.f32 %v376, %v410
    %414 = vrot.lane.b32.xlu0 %v395, 32
    %v415 = vpop.permute.xlu0 %414
    %418 = vrot.lane.b32.xlu0 %v412, 64
    %v419 = vpop.permute.xlu0 %418
    %v421 = vsel %vm117, %v415, %v419
    %v422 = vrot.slane %v73, 4
    %v423 = vrot.slane %v74, 4
    %v427 = vsel %vm125, %v421, 0
    %429 = vmatpush.msra.mxu0 0.0
    %430 = vmatpush.msra.mxu0 0.0
    %431 = vmatpush.msra.mxu0 0.0
    %432 = vmatpush.msra.mxu0 0.0
    %433 = vmatpush.msra.mxu0 0.0
    %434 = vmatpush.msra.mxu0 0.0
    %435 = vmatpush.msra.mxu0 0.0
    %436 = vmatpush.msra.mxu0 0.0
    %437 = vmatpush.msra.mxu0 %v89
    %438 = vmatpush.msra.mxu0 %v87
    %439 = vmatpush.msra.mxu0 %v85
    %440 = vmatpush.msra.mxu0 %v83
    %441 = vmatpush.msra.mxu0 %v81
    %442 = vmatpush.msra.mxu0 %v79
    %443 = vmatpush.msra.mxu0 %v77
    %444 = vmatpush.msra.mxu0 %v75
    %445 = vmatmul.f32.gmra.mxu0 %v427
    %v446 = vpop.f32.mrf.mxu0
    %v447 = vadd.f32 %v422, %v446
    %448 = vdwg.mxu0
    %449 = vmatpush.msra.mxu0 0.0
    %450 = vmatpush.msra.mxu0 0.0
    %451 = vmatpush.msra.mxu0 0.0
    %452 = vmatpush.msra.mxu0 0.0
    %453 = vmatpush.msra.mxu0 0.0
    %454 = vmatpush.msra.mxu0 0.0
    %455 = vmatpush.msra.mxu0 0.0
    %456 = vmatpush.msra.mxu0 0.0
    %457 = vmatpush.msra.mxu0 %v90
    %458 = vmatpush.msra.mxu0 %v88
    %459 = vmatpush.msra.mxu0 %v86
    %460 = vmatpush.msra.mxu0 %v84
    %461 = vmatpush.msra.mxu0 %v82
    %462 = vmatpush.msra.mxu0 %v80
    %463 = vmatpush.msra.mxu0 %v78
    %464 = vmatpush.msra.mxu0 %v76
    %465 = vmatmul.f32.gmra.mxu0 %v427
    %v466 = vpop.f32.mrf.mxu0
    %v467 = vadd.f32 %v423, %v466
    %468 = vdwg.mxu0
    %v469 = vmul.f32 %v447, 0.5
    %v470 = vmul.f32 %v467, 0.5
    %v471 = vtanh.pop %v469
    %v472 = vtanh.pop %v470
    %v473 = vmul.f32 %v471, 0.5
    %v474 = vmul.f32 %v472, 0.5
    %v475 = vadd.f32 %v473, 0.5
    %v476 = vadd.f32 %v474, 0.5
    %v477 = vtanh.pop %v447
    %v478 = vtanh.pop %v467
    %v479 = vmul.f32 %v475, %v389
    %481 = vrot.lane.b32.xlu0 %v477, 64
    %v482 = vpop.permute.xlu0 %481
    %v484 = vmul.f32 %v475, %v482
    %486 = vrot.lane.b32.xlu0 %v484, 32
    %v487 = vpop.permute.xlu0 %486
    %v489 = vadd.f32 %v479, %v487
    %v490 = vtanh.pop %v489
    %492 = vrot.lane.b32.xlu0 %v490, 64
    %v493 = vpop.permute.xlu0 %492
    %v495 = vmul.f32 %v475, %v493
    %v496 = vmul.f32 %v476, %v406
    %498 = vrot.lane.b32.xlu0 %v478, 64
    %v499 = vpop.permute.xlu0 %498
    %v501 = vmul.f32 %v476, %v499
    %503 = vrot.lane.b32.xlu0 %v501, 32
    %v504 = vpop.permute.xlu0 %503
    %v506 = vadd.f32 %v496, %v504
    %v507 = vtanh.pop %v506
    %509 = vrot.lane.b32.xlu0 %v507, 64
    %v510 = vpop.permute.xlu0 %509
    %v512 = vmul.f32 %v476, %v510
    %514 = vrot.lane.b32.xlu0 %v495, 32
    %v515 = vpop.permute.xlu0 %514
    %518 = vrot.lane.b32.xlu0 %v512, 64
    %v519 = vpop.permute.xlu0 %518
    %v521 = vsel %vm117, %v515, %v519
    %v522 = vrot.slane %v73, 5
    %v523 = vrot.slane %v74, 5
    %v527 = vsel %vm125, %v521, 0
    %529 = vmatpush.msra.mxu0 0.0
    %530 = vmatpush.msra.mxu0 0.0
    %531 = vmatpush.msra.mxu0 0.0
    %532 = vmatpush.msra.mxu0 0.0
    %533 = vmatpush.msra.mxu0 0.0
    %534 = vmatpush.msra.mxu0 0.0
    %535 = vmatpush.msra.mxu0 0.0
    %536 = vmatpush.msra.mxu0 0.0
    %537 = vmatpush.msra.mxu0 %v89
    %538 = vmatpush.msra.mxu0 %v87
    %539 = vmatpush.msra.mxu0 %v85
    %540 = vmatpush.msra.mxu0 %v83
    %541 = vmatpush.msra.mxu0 %v81
    %542 = vmatpush.msra.mxu0 %v79
    %543 = vmatpush.msra.mxu0 %v77
    %544 = vmatpush.msra.mxu0 %v75
    %545 = vmatmul.f32.gmra.mxu0 %v527
    %v546 = vpop.f32.mrf.mxu0
    %v547 = vadd.f32 %v522, %v546
    %548 = vdwg.mxu0
    %549 = vmatpush.msra.mxu0 0.0
    %550 = vmatpush.msra.mxu0 0.0
    %551 = vmatpush.msra.mxu0 0.0
    %552 = vmatpush.msra.mxu0 0.0
    %553 = vmatpush.msra.mxu0 0.0
    %554 = vmatpush.msra.mxu0 0.0
    %555 = vmatpush.msra.mxu0 0.0
    %556 = vmatpush.msra.mxu0 0.0
    %557 = vmatpush.msra.mxu0 %v90
    %558 = vmatpush.msra.mxu0 %v88
    %559 = vmatpush.msra.mxu0 %v86
    %560 = vmatpush.msra.mxu0 %v84
    %561 = vmatpush.msra.mxu0 %v82
    %562 = vmatpush.msra.mxu0 %v80
    %563 = vmatpush.msra.mxu0 %v78
    %564 = vmatpush.msra.mxu0 %v76
    %565 = vmatmul.f32.gmra.mxu0 %v527
    %v566 = vpop.f32.mrf.mxu0
    %v567 = vadd.f32 %v523, %v566
    %568 = vdwg.mxu0
    %v569 = vmul.f32 %v547, 0.5
    %v570 = vmul.f32 %v567, 0.5
    %v571 = vtanh.pop %v569
    %v572 = vtanh.pop %v570
    %v573 = vmul.f32 %v571, 0.5
    %v574 = vmul.f32 %v572, 0.5
    %v575 = vadd.f32 %v573, 0.5
    %v576 = vadd.f32 %v574, 0.5
    %v577 = vtanh.pop %v547
    %v578 = vtanh.pop %v567
    %v579 = vmul.f32 %v575, %v489
    %581 = vrot.lane.b32.xlu0 %v577, 64
    %v582 = vpop.permute.xlu0 %581
    %v584 = vmul.f32 %v575, %v582
    %586 = vrot.lane.b32.xlu0 %v584, 32
    %v587 = vpop.permute.xlu0 %586
    %v589 = vadd.f32 %v579, %v587
    %v590 = vtanh.pop %v589
    %592 = vrot.lane.b32.xlu0 %v590, 64
    %v593 = vpop.permute.xlu0 %592
    %v595 = vmul.f32 %v575, %v593
    %v596 = vmul.f32 %v576, %v506
    %598 = vrot.lane.b32.xlu0 %v578, 64
    %v599 = vpop.permute.xlu0 %598
    %v601 = vmul.f32 %v576, %v599
    %603 = vrot.lane.b32.xlu0 %v601, 32
    %v604 = vpop.permute.xlu0 %603
    %v606 = vadd.f32 %v596, %v604
    %v607 = vtanh.pop %v606
    %609 = vrot.lane.b32.xlu0 %v607, 64
    %v610 = vpop.permute.xlu0 %609
    %v612 = vmul.f32 %v576, %v610
    %614 = vrot.lane.b32.xlu0 %v595, 32
    %v615 = vpop.permute.xlu0 %614
    %618 = vrot.lane.b32.xlu0 %v612, 64
    %v619 = vpop.permute.xlu0 %618
    %v621 = vsel %vm117, %v615, %v619
    %v622 = vrot.slane %v73, 6
    %v623 = vrot.slane %v74, 6
    %v627 = vsel %vm125, %v621, 0
    %629 = vmatpush.msra.mxu0 0.0
    %630 = vmatpush.msra.mxu0 0.0
    %631 = vmatpush.msra.mxu0 0.0
    %632 = vmatpush.msra.mxu0 0.0
    %633 = vmatpush.msra.mxu0 0.0
    %634 = vmatpush.msra.mxu0 0.0
    %635 = vmatpush.msra.mxu0 0.0
    %636 = vmatpush.msra.mxu0 0.0
    %637 = vmatpush.msra.mxu0 %v89
    %638 = vmatpush.msra.mxu0 %v87
    %639 = vmatpush.msra.mxu0 %v85
    %640 = vmatpush.msra.mxu0 %v83
    %641 = vmatpush.msra.mxu0 %v81
    %642 = vmatpush.msra.mxu0 %v79
    %643 = vmatpush.msra.mxu0 %v77
    %644 = vmatpush.msra.mxu0 %v75
    %645 = vmatmul.f32.gmra.mxu0 %v627
    %v646 = vpop.f32.mrf.mxu0
    %v647 = vadd.f32 %v622, %v646
    %648 = vdwg.mxu0
    %649 = vmatpush.msra.mxu0 0.0
    %650 = vmatpush.msra.mxu0 0.0
    %651 = vmatpush.msra.mxu0 0.0
    %652 = vmatpush.msra.mxu0 0.0
    %653 = vmatpush.msra.mxu0 0.0
    %654 = vmatpush.msra.mxu0 0.0
    %655 = vmatpush.msra.mxu0 0.0
    %656 = vmatpush.msra.mxu0 0.0
    %657 = vmatpush.msra.mxu0 %v90
    %658 = vmatpush.msra.mxu0 %v88
    %659 = vmatpush.msra.mxu0 %v86
    %660 = vmatpush.msra.mxu0 %v84
    %661 = vmatpush.msra.mxu0 %v82
    %662 = vmatpush.msra.mxu0 %v80
    %663 = vmatpush.msra.mxu0 %v78
    %664 = vmatpush.msra.mxu0 %v76
    %665 = vmatmul.f32.gmra.mxu0 %v627
    %v666 = vpop.f32.mrf.mxu0
    %v667 = vadd.f32 %v623, %v666
    %668 = vdwg.mxu0
    %v669 = vmul.f32 %v647, 0.5
    %v670 = vmul.f32 %v667, 0.5
    %v671 = vtanh.pop %v669
    %v672 = vtanh.pop %v670
    %v673 = vmul.f32 %v671, 0.5
    %v674 = vmul.f32 %v672, 0.5
    %v675 = vadd.f32 %v673, 0.5
    %v676 = vadd.f32 %v674, 0.5
    %v677 = vtanh.pop %v647
    %v678 = vtanh.pop %v667
    %v679 = vmul.f32 %v675, %v589
    %681 = vrot.lane.b32.xlu0 %v677, 64
    %v682 = vpop.permute.xlu0 %681
    %v684 = vmul.f32 %v675, %v682
    %686 = vrot.lane.b32.xlu0 %v684, 32
    %v687 = vpop.permute.xlu0 %686
    %v689 = vadd.f32 %v679, %v687
    %v690 = vtanh.pop %v689
    %692 = vrot.lane.b32.xlu0 %v690, 64
    %v693 = vpop.permute.xlu0 %692
    %v695 = vmul.f32 %v675, %v693
    %v696 = vmul.f32 %v676, %v606
    %698 = vrot.lane.b32.xlu0 %v678, 64
    %v699 = vpop.permute.xlu0 %698
    %v701 = vmul.f32 %v676, %v699
    %703 = vrot.lane.b32.xlu0 %v701, 32
    %v704 = vpop.permute.xlu0 %703
    %v706 = vadd.f32 %v696, %v704
    %v707 = vtanh.pop %v706
    %709 = vrot.lane.b32.xlu0 %v707, 64
    %v710 = vpop.permute.xlu0 %709
    %v712 = vmul.f32 %v676, %v710
    %714 = vrot.lane.b32.xlu0 %v695, 32
    %v715 = vpop.permute.xlu0 %714
    %718 = vrot.lane.b32.xlu0 %v712, 64
    %v719 = vpop.permute.xlu0 %718
    %v721 = vsel %vm117, %v715, %v719
    %v722 = vrot.slane %v73, 7
    %v723 = vrot.slane %v74, 7
    %v727 = vsel %vm125, %v721, 0
    %729 = vmatpush.msra.mxu0 0.0
    %730 = vmatpush.msra.mxu0 0.0
    %731 = vmatpush.msra.mxu0 0.0
    %732 = vmatpush.msra.mxu0 0.0
    %733 = vmatpush.msra.mxu0 0.0
    %734 = vmatpush.msra.mxu0 0.0
    %735 = vmatpush.msra.mxu0 0.0
    %736 = vmatpush.msra.mxu0 0.0
    %737 = vmatpush.msra.mxu0 %v89
    %738 = vmatpush.msra.mxu0 %v87
    %739 = vmatpush.msra.mxu0 %v85
    %740 = vmatpush.msra.mxu0 %v83
    %741 = vmatpush.msra.mxu0 %v81
    %742 = vmatpush.msra.mxu0 %v79
    %743 = vmatpush.msra.mxu0 %v77
    %744 = vmatpush.msra.mxu0 %v75
    %745 = vmatmul.f32.gmra.mxu0 %v727
    %v746 = vpop.f32.mrf.mxu0
    %v747 = vadd.f32 %v722, %v746
    %748 = vdwg.mxu0
    %749 = vmatpush.msra.mxu0 0.0
    %750 = vmatpush.msra.mxu0 0.0
    %751 = vmatpush.msra.mxu0 0.0
    %752 = vmatpush.msra.mxu0 0.0
    %753 = vmatpush.msra.mxu0 0.0
    %754 = vmatpush.msra.mxu0 0.0
    %755 = vmatpush.msra.mxu0 0.0
    %756 = vmatpush.msra.mxu0 0.0
    %757 = vmatpush.msra.mxu0 %v90
    %758 = vmatpush.msra.mxu0 %v88
    %759 = vmatpush.msra.mxu0 %v86
    %760 = vmatpush.msra.mxu0 %v84
    %761 = vmatpush.msra.mxu0 %v82
    %762 = vmatpush.msra.mxu0 %v80
    %763 = vmatpush.msra.mxu0 %v78
    %764 = vmatpush.msra.mxu0 %v76
    %765 = vmatmul.f32.gmra.mxu0 %v727
    %v766 = vpop.f32.mrf.mxu0
    %v767 = vadd.f32 %v723, %v766
    %768 = vdwg.mxu0
    %v769 = vmul.f32 %v747, 0.5
    %v770 = vmul.f32 %v767, 0.5
    %v771 = vtanh.pop %v769
    %v772 = vtanh.pop %v770
    %v773 = vmul.f32 %v771, 0.5
    %v774 = vmul.f32 %v772, 0.5
    %v775 = vadd.f32 %v773, 0.5
    %v776 = vadd.f32 %v774, 0.5
    %v777 = vtanh.pop %v747
    %v778 = vtanh.pop %v767
    %v779 = vmul.f32 %v775, %v689
    %781 = vrot.lane.b32.xlu0 %v777, 64
    %v782 = vpop.permute.xlu0 %781
    %v784 = vmul.f32 %v775, %v782
    %786 = vrot.lane.b32.xlu0 %v784, 32
    %v787 = vpop.permute.xlu0 %786
    %v789 = vadd.f32 %v779, %v787
    %v790 = vtanh.pop %v789
    %792 = vrot.lane.b32.xlu0 %v790, 64
    %v793 = vpop.permute.xlu0 %792
    %v795 = vmul.f32 %v775, %v793
    %v796 = vmul.f32 %v776, %v706
    %798 = vrot.lane.b32.xlu0 %v778, 64
    %v799 = vpop.permute.xlu0 %798
    %v801 = vmul.f32 %v776, %v799
    %803 = vrot.lane.b32.xlu0 %v801, 32
    %v804 = vpop.permute.xlu0 %803
    %v806 = vadd.f32 %v796, %v804
    %v807 = vtanh.pop %v806
    %809 = vrot.lane.b32.xlu0 %v807, 64
    %v810 = vpop.permute.xlu0 %809
    %v812 = vmul.f32 %v776, %v810
    %814 = vrot.lane.b32.xlu0 %v795, 32
    %v815 = vpop.permute.xlu0 %814
    %818 = vrot.lane.b32.xlu0 %v812, 64
    %v819 = vpop.permute.xlu0 %818
    %v821 = vsel %vm117, %v815, %v819
    %v823 = vsel %vm125, %v821, 0
    %825 = vmatpush.msra.mxu0 0.0
    %826 = vmatpush.msra.mxu0 0.0
    %827 = vmatpush.msra.mxu0 0.0
    %828 = vmatpush.msra.mxu0 0.0
    %829 = vmatpush.msra.mxu0 0.0
    %830 = vmatpush.msra.mxu0 0.0
    %831 = vmatpush.msra.mxu0 0.0
    %832 = vmatpush.msra.mxu0 0.0
    %833 = vmatpush.msra.mxu0 %v90
    %834 = vmatpush.msra.mxu0 %v88
    %835 = vmatpush.msra.mxu0 %v86
    %836 = vmatpush.msra.mxu0 %v84
    %837 = vmatpush.msra.mxu0 %v82
    %838 = vmatpush.msra.mxu0 %v80
    %839 = vmatpush.msra.mxu0 %v78
    %840 = vmatpush.msra.mxu0 %v76
    %841 = vmatmul.f32.gmra.mxu0 %v823
    %v842 = vpop.f32.mrf.mxu0
    %v843 = vadd.f32 %v74, %v842
    %844 = vdwg.mxu0
    %v845 = vmul.f32 %v843, 0.5
    %v846 = vtanh.pop %v845
    %v847 = vmul.f32 %v846, 0.5
    %v848 = vadd.f32 %v847, 0.5
    %v849 = vtanh.pop %v843
    %v850 = vmul.f32 %v848, %v806
    %852 = vrot.lane.b32.xlu0 %v849, 64
    %v853 = vpop.permute.xlu0 %852
    %v855 = vmul.f32 %v848, %v853
    %857 = vrot.lane.b32.xlu0 %v855, 32
    %v858 = vpop.permute.xlu0 %857
    %v860 = vadd.f32 %v850, %v858
    %v861 = vtanh.pop %v860
    %863 = vrot.lane.b32.xlu0 %v861, 64
    %v864 = vpop.permute.xlu0 %863
    %v866 = vmul.f32 %v848, %v864
    %v867 = vld [vmem:[%s4] sm:$0xff]
    %v868 = vld [vmem:[%s4 + $0x8] sm:$0xff]
    %v869 = vld [vmem:[%s4 + $0x10] sm:$0xff]
    %v870 = vld [vmem:[%s4 + $0x18] sm:$0xff]
    %v871 = vld [vmem:[%s5] sm:$0x1]
    %873 = vrot.lane.b32.xlu0 %v866, 32
    %v874 = vpop.permute.xlu0 %873
    %v875 = vsel %vm117, %v874, 0
    %877 = vmatpush.msra.mxu0 0.0
    %878 = vmatpush.msra.mxu0 0.0
    %879 = vmatpush.msra.mxu0 0.0
    %880 = vmatpush.msra.mxu0 0.0
    %881 = vmatpush.msra.mxu0 0.0
    %882 = vmatpush.msra.mxu0 0.0
    %883 = vmatpush.msra.mxu0 0.0
    %884 = vmatpush.msra.mxu0 0.0
    %885 = vmatpush.msra.mxu0 0.0
    %886 = vmatpush.msra.mxu0 0.0
    %887 = vmatpush.msra.mxu0 0.0
    %888 = vmatpush.msra.mxu0 0.0
    %889 = vmatpush.msra.mxu0 %v870
    %890 = vmatpush.msra.mxu0 %v869
    %891 = vmatpush.msra.mxu0 %v868
    %892 = vmatpush.msra.mxu0 %v867
    %893 = vmatmul.f32.gmra.mxu0 %v875
    %v894 = vpop.f32.mrf.mxu0
    %v895 = vadd.f32 %v871, %v894
    %896 = vdwg.mxu0
    %vm897 = vcmask 24576
    %898 = vst.msk [vmem:[#allocation5] sm:$0x1] %vm897, %v895
    // Predicated region
    $region30: #{tpu_custom_call.1} parent=1 // pred_check
      _
    $region31: #{tpu_custom_call.1} parent=1 // pred_check_branch
      %900 = sbr.rel (0) target = $region33
    $region32: #{tpu_custom_call.1} parent=1 // pred_region
      %902 = vsyncadd [#allocation4], 0
      %s904 = sshll.u32 [#allocation5], 4
      %s905 = int_to_ptr.vmem [resolvable:$true] %s904
      %s906 = sshll.u32 %s6, 4
      %s907 = int_to_ptr.hbm [resolvable:$true] %s906
      %909 = dma.vmem_to_hbm [thread:$0]  %s905, 16, %s907, [#allocation4]
    $region33: #{tpu_custom_call.1} parent=1 // pred_fallthru
      _
    // Predicated region
    $region34: #{tpu_custom_call.1} parent=1 // pred_check
      _
    $region35: #{tpu_custom_call.1} parent=1 // pred_check_branch
      %911 = sbr.rel (0) target = $region37
    $region36: #{tpu_custom_call.1} parent=1 // pred_region
      %913 = dma.done [#allocation4], 16
    $region37: #{tpu_custom_call.1} parent=1 // pred_fallthru
      _
    %914 = vsyncpa [#allocation3], 1
    %915 = vsyncpa [#allocation4], 1

</llo_original>
